<compile_context>
chip_gen: v5e
topology: v5e:2x2
jax: 0.10.0
libtpu: 0.0.40
codegen_flags: <defaults>
</compile_context>

<pallas_src>
import functools

import jax
import jax.numpy as jnp
from jax.experimental import pallas as pl
from jax.experimental.pallas import tpu as pltpu


def _prenet_kernel(x_ref, w1_ref, b1_ref, w2_ref, b2_ref, w3_ref, b3_ref,
                   m1_ref, m2_ref, pos_ref, alpha_ref, o_ref, *, inv_keep):
    """Fused DecoderPrenet for one (batch, time-block) tile.

    x_ref     : (1, d_input,  t_block)  mel slice (channel-major)
    w1/b1     : (d_prenet, d_input) / (d_prenet, 1)
    w2/b2     : (d_prenet, d_prenet) / (d_prenet, 1)
    w3/b3     : (d_model,  d_prenet) / (d_model, 1)
    m1/m2     : (1, d_prenet, t_block)  dropout keep-masks (0/1, f32)
    pos_ref   : (d_model, t_block)      positional table slice (transposed)
    alpha_ref : (1, 1)                  learnable positional scale
    o_ref     : (1, t_block, d_model)
    """
    x = x_ref[0]                                                 # (d_input, t_block)

    # Layer 1: Linear + ReLU + dropout. Channel-major -> lane-dense N = t_block.
    h = jnp.dot(w1_ref[...], x, preferred_element_type=jnp.float32) + b1_ref[...]
    h = jnp.maximum(h, 0.0) * (m1_ref[0] * inv_keep)

    # Layer 2: Linear + ReLU + dropout.
    h = jnp.dot(w2_ref[...], h, preferred_element_type=jnp.float32) + b2_ref[...]
    h = jnp.maximum(h, 0.0) * (m2_ref[0] * inv_keep)

    # Projection + positional encoding (still channel-major: (d_model, t_block)).
    y = jnp.dot(w3_ref[...], h, preferred_element_type=jnp.float32) + b3_ref[...]
    y = y + alpha_ref[...] * pos_ref[...]

    # Single XLU transpose to the module's (T, d_model) output layout.
    o_ref[0] = y.T.astype(o_ref.dtype)


def decoder_prenet_forward(mel, params, masks, *, p=0.5, t_block=128):
    """mel: (B, d_input, T) f32 -> (B, T, d_model) f32."""
    B, d_input, T = mel.shape
    w1, w2, w3 = params["w1"], params["w2"], params["w3"]
    d_prenet = w1.shape[0]
    d_model = w3.shape[0]
    t_block = min(t_block, T)
    assert T % t_block == 0, (T, t_block)

    # One-time parameter prep (tiny): column-vector biases, transposed pos table.
    b1 = params["b1"].reshape(d_prenet, 1).astype(jnp.float32)
    b2 = params["b2"].reshape(d_prenet, 1).astype(jnp.float32)
    b3 = params["b3"].reshape(d_model, 1).astype(jnp.float32)
    pos = jnp.transpose(params["pos_table"][:T], (1, 0)).astype(jnp.float32)  # (d_model, T)
    alpha = params["alpha"].reshape(1, 1).astype(jnp.float32)
    m1, m2 = masks

    kernel = functools.partial(_prenet_kernel, inv_keep=1.0 / (1.0 - p))

    return pl.pallas_call(
        kernel,
        out_shape=jax.ShapeDtypeStruct((B, T, d_model), jnp.float32),
        grid_spec=pltpu.PrefetchScalarGridSpec(
            num_scalar_prefetch=0,
            grid=(B, T // t_block),
            in_specs=[
                pl.BlockSpec((1, d_input, t_block), lambda b, t: (b, 0, t)),   # mel
                pl.BlockSpec((d_prenet, d_input), lambda b, t: (0, 0)),        # w1
                pl.BlockSpec((d_prenet, 1), lambda b, t: (0, 0)),              # b1
                pl.BlockSpec((d_prenet, d_prenet), lambda b, t: (0, 0)),       # w2
                pl.BlockSpec((d_prenet, 1), lambda b, t: (0, 0)),              # b2
                pl.BlockSpec((d_model, d_prenet), lambda b, t: (0, 0)),        # w3
                pl.BlockSpec((d_model, 1), lambda b, t: (0, 0)),               # b3
                pl.BlockSpec((1, d_prenet, t_block), lambda b, t: (b, 0, t)),  # mask1
                pl.BlockSpec((1, d_prenet, t_block), lambda b, t: (b, 0, t)),  # mask2
                pl.BlockSpec((d_model, t_block), lambda b, t: (0, t)),         # pos
                pl.BlockSpec((1, 1), lambda b, t: (0, 0)),                     # alpha
            ],
            out_specs=pl.BlockSpec((1, t_block, d_model), lambda b, t: (b, t, 0)),
        ),
        compiler_params=pltpu.CompilerParams(
            dimension_semantics=("parallel", "parallel")),
    )(mel, w1, b1, w2, b2, w3, b3, m1, m2, pos, alpha)


def sinusoid_encoding_table(n_position, d_hid):
    """Matches PositionalEncoding._get_sinusoid_encoding_table (without batch dim)."""
    position = jnp.arange(n_position, dtype=jnp.float32)[:, None]          # (n, 1)
    hid = jnp.arange(d_hid)
    exponent = (2.0 * (hid // 2).astype(jnp.float32)) / float(d_hid)
    angle = position / jnp.power(10000.0, exponent)[None, :]               # (n, d)
    table = jnp.where((hid % 2) == 0, jnp.sin(angle), jnp.cos(angle))
    return table.astype(jnp.float32)                                       # (n_position, d_hid)


def make_prenet_params(key, d_input, d_prenet, d_model, n_position):
    """Deterministic synthetic parameters matching the PyTorch module shapes."""
    k1, k2, k3, k4, k5, k6, k7 = jax.random.split(key, 7)
    return dict(
        w1=0.1 * jax.random.normal(k1, (d_prenet, d_input), jnp.float32),
        b1=0.1 * jax.random.normal(k2, (d_prenet,), jnp.float32),
        w2=0.1 * jax.random.normal(k3, (d_prenet, d_prenet), jnp.float32),
        b2=0.1 * jax.random.normal(k4, (d_prenet,), jnp.float32),
        w3=0.1 * jax.random.normal(k5, (d_model, d_prenet), jnp.float32),
        b3=0.1 * jax.random.normal(k6, (d_model,), jnp.float32),
        alpha=1.0 + 0.1 * jax.random.normal(k7, (1,), jnp.float32),
        pos_table=sinusoid_encoding_table(n_position, d_model),
    )


def decoder_prenet_reference(mel, params, masks, *, p=0.5):
    """Pure-JAX reference mirroring the PyTorch forward (same dropout masks)."""
    scale = 1.0 / (1.0 - p)
    x = jnp.transpose(mel, (0, 2, 1))                                      # (B, T, d_input)
    h = jnp.maximum(x @ params["w1"].T + params["b1"], 0.0)
    h = h * jnp.transpose(masks[0], (0, 2, 1)) * scale
    h = jnp.maximum(h @ params["w2"].T + params["b2"], 0.0)
    h = h * jnp.transpose(masks[1], (0, 2, 1)) * scale
    y = h @ params["w3"].T + params["b3"]
    T = y.shape[1]
    return y + params["alpha"][0] * params["pos_table"][None, :T, :]


if __name__ == "__main__":
    # Small hparams: d_input=32 (mel), d_prenet=64, d_model=128, n_position=256.
    B, T = 2, 128
    d_input, d_prenet, d_model, n_position = 32, 64, 128, 256
    p = 0.5

    key = jax.random.PRNGKey(0)
    kx, kp, km1, km2 = jax.random.split(key, 4)
    mel = jax.random.normal(kx, (B, d_input, T), jnp.float32)
    params = make_prenet_params(kp, d_input, d_prenet, d_model, n_position)
    # Always-on dropout (training=True): keep-prob = 1 - p, scaled inside the kernel.
    masks = (
        jax.random.bernoulli(km1, 1.0 - p, (B, d_prenet, T)).astype(jnp.float32),
        jax.random.bernoulli(km2, 1.0 - p, (B, d_prenet, T)).astype(jnp.float32),
    )

    out = decoder_prenet_forward(mel, params, masks, p=p)
    out = jax.block_until_ready(out)

    ref = decoder_prenet_reference(mel, params, masks, p=p)
    assert out.shape == (B, T, d_model), out.shape
    max_err = float(jnp.max(jnp.abs(out - ref)))
    assert jnp.allclose(out, ref, atol=1e-4, rtol=1e-4), max_err

    print("KERNEL_OK")
</pallas_src>

<mosaic_0001>
module attributes {stable_mosaic.version = 11 : i64} {
  func.func @_prenet_kernel(%arg0: i32, %arg1: i32, %arg2: memref<1x32x128xf32, #tpu.memory_space<vmem>>, %arg3: memref<64x32xf32, #tpu.memory_space<vmem>>, %arg4: memref<64x1xf32, #tpu.memory_space<vmem>>, %arg5: memref<64x64xf32, #tpu.memory_space<vmem>>, %arg6: memref<64x1xf32, #tpu.memory_space<vmem>>, %arg7: memref<128x64xf32, #tpu.memory_space<vmem>>, %arg8: memref<128x1xf32, #tpu.memory_space<vmem>>, %arg9: memref<1x64x128xf32, #tpu.memory_space<vmem>>, %arg10: memref<1x64x128xf32, #tpu.memory_space<vmem>>, %arg11: memref<128x128xf32, #tpu.memory_space<vmem>>, %arg12: memref<1x1xf32, #tpu.memory_space<vmem>>, %arg13: memref<1x128x128xf32, #tpu.memory_space<vmem>>) attributes {dimension_semantics = [#tpu.dimension_semantics<parallel>, #tpu.dimension_semantics<parallel>], iteration_bounds = array<i64: 2, 1>, scalar_prefetch = 0 : i64, scratch_operands = 0 : i64, tpu.core_type = #tpu.core_type<tc>, window_params = [{transform_indices = @transform_0, window_bounds = array<i64: 1, 32, 128>}, {pipeline_mode = #tpu.pipeline_mode<synchronous>, transform_indices = @transform_1, window_bounds = array<i64: 64, 32>}, {pipeline_mode = #tpu.pipeline_mode<synchronous>, transform_indices = @transform_2, window_bounds = array<i64: 64, 1>}, {pipeline_mode = #tpu.pipeline_mode<synchronous>, transform_indices = @transform_3, window_bounds = array<i64: 64, 64>}, {pipeline_mode = #tpu.pipeline_mode<synchronous>, transform_indices = @transform_4, window_bounds = array<i64: 64, 1>}, {pipeline_mode = #tpu.pipeline_mode<synchronous>, transform_indices = @transform_5, window_bounds = array<i64: 128, 64>}, {pipeline_mode = #tpu.pipeline_mode<synchronous>, transform_indices = @transform_6, window_bounds = array<i64: 128, 1>}, {transform_indices = @transform_7, window_bounds = array<i64: 1, 64, 128>}, {transform_indices = @transform_8, window_bounds = array<i64: 1, 64, 128>}, {transform_indices = @transform_9, window_bounds = array<i64: 128, 128>}, {pipeline_mode = #tpu.pipeline_mode<synchronous>, transform_indices = @transform_10, window_bounds = array<i64: 1, 1>}, {transform_indices = @transform_11, window_bounds = array<i64: 1, 128, 128>}]} {
    %c0 = arith.constant 0 : index
    %c0_0 = arith.constant 0 : index
    %c0_1 = arith.constant 0 : index
    %0 = vector.load %arg2[%c0, %c0_0, %c0_1] : memref<1x32x128xf32, #tpu.memory_space<vmem>>, vector<1x32x128xf32>
    %1 = vector.shape_cast %0 : vector<1x32x128xf32> to vector<32x128xf32>
    %c0_2 = arith.constant 0 : index
    %c0_3 = arith.constant 0 : index
    %2 = vector.load %arg3[%c0_2, %c0_3] : memref<64x32xf32, #tpu.memory_space<vmem>>, vector<64x32xf32>
    %cst = arith.constant dense<0.000000e+00> : vector<64x128xf32>
    %3 = tpu.matmul %2, %1, %cst {dimension_numbers = #tpu.dot_dimension_numbers<[1], [0], [0], [1], [0, 0, 1, 1], [], []>} : vector<64x32xf32>, vector<32x128xf32>, vector<64x128xf32> -> vector<64x128xf32>
    %c0_4 = arith.constant 0 : index
    %c0_5 = arith.constant 0 : index
    %4 = vector.load %arg4[%c0_4, %c0_5] : memref<64x1xf32, #tpu.memory_space<vmem>>, vector<64x1xf32>
    %5 = vector.broadcast %4 : vector<64x1xf32> to vector<64x128xf32>
    %6 = arith.addf %3, %5 : vector<64x128xf32>
    %cst_6 = arith.constant 0.000000e+00 : f32
    %7 = vector.broadcast %cst_6 : f32 to vector<64x128xf32>
    %8 = arith.maximumf %6, %7 : vector<64x128xf32>
    %c0_7 = arith.constant 0 : index
    %c0_8 = arith.constant 0 : index
    %c0_9 = arith.constant 0 : index
    %9 = vector.load %arg9[%c0_7, %c0_8, %c0_9] : memref<1x64x128xf32, #tpu.memory_space<vmem>>, vector<1x64x128xf32>
    %10 = vector.shape_cast %9 : vector<1x64x128xf32> to vector<64x128xf32>
    %cst_10 = arith.constant 2.000000e+00 : f32
    %11 = vector.broadcast %cst_10 : f32 to vector<64x128xf32>
    %12 = arith.mulf %10, %11 : vector<64x128xf32>
    %13 = arith.mulf %8, %12 : vector<64x128xf32>
    %c0_11 = arith.constant 0 : index
    %c0_12 = arith.constant 0 : index
    %14 = vector.load %arg5[%c0_11, %c0_12] : memref<64x64xf32, #tpu.memory_space<vmem>>, vector<64x64xf32>
    %cst_13 = arith.constant dense<0.000000e+00> : vector<64x128xf32>
    %15 = tpu.matmul %14, %13, %cst_13 {dimension_numbers = #tpu.dot_dimension_numbers<[1], [0], [0], [1], [0, 0, 1, 1], [], []>} : vector<64x64xf32>, vector<64x128xf32>, vector<64x128xf32> -> vector<64x128xf32>
    %c0_14 = arith.constant 0 : index
    %c0_15 = arith.constant 0 : index
    %16 = vector.load %arg6[%c0_14, %c0_15] : memref<64x1xf32, #tpu.memory_space<vmem>>, vector<64x1xf32>
    %17 = vector.broadcast %16 : vector<64x1xf32> to vector<64x128xf32>
    %18 = arith.addf %15, %17 : vector<64x128xf32>
    %cst_16 = arith.constant 0.000000e+00 : f32
    %19 = vector.broadcast %cst_16 : f32 to vector<64x128xf32>
    %20 = arith.maximumf %18, %19 : vector<64x128xf32>
    %c0_17 = arith.constant 0 : index
    %c0_18 = arith.constant 0 : index
    %c0_19 = arith.constant 0 : index
    %21 = vector.load %arg10[%c0_17, %c0_18, %c0_19] : memref<1x64x128xf32, #tpu.memory_space<vmem>>, vector<1x64x128xf32>
    %22 = vector.shape_cast %21 : vector<1x64x128xf32> to vector<64x128xf32>
    %cst_20 = arith.constant 2.000000e+00 : f32
    %23 = vector.broadcast %cst_20 : f32 to vector<64x128xf32>
    %24 = arith.mulf %22, %23 : vector<64x128xf32>
    %25 = arith.mulf %20, %24 : vector<64x128xf32>
    %c0_21 = arith.constant 0 : index
    %c0_22 = arith.constant 0 : index
    %26 = vector.load %arg7[%c0_21, %c0_22] : memref<128x64xf32, #tpu.memory_space<vmem>>, vector<128x64xf32>
    %cst_23 = arith.constant dense<0.000000e+00> : vector<128x128xf32>
    %27 = tpu.matmul %26, %25, %cst_23 {dimension_numbers = #tpu.dot_dimension_numbers<[1], [0], [0], [1], [0, 0, 1, 1], [], []>} : vector<128x64xf32>, vector<64x128xf32>, vector<128x128xf32> -> vector<128x128xf32>
    %c0_24 = arith.constant 0 : index
    %c0_25 = arith.constant 0 : index
    %28 = vector.load %arg8[%c0_24, %c0_25] : memref<128x1xf32, #tpu.memory_space<vmem>>, vector<128x1xf32>
    %29 = vector.broadcast %28 : vector<128x1xf32> to vector<128x128xf32>
    %30 = arith.addf %27, %29 : vector<128x128xf32>
    %c0_26 = arith.constant 0 : index
    %c0_27 = arith.constant 0 : index
    %31 = vector.load %arg12[%c0_26, %c0_27] : memref<1x1xf32, #tpu.memory_space<vmem>>, vector<1x1xf32>
    %c0_28 = arith.constant 0 : index
    %c0_29 = arith.constant 0 : index
    %32 = vector.load %arg11[%c0_28, %c0_29] : memref<128x128xf32, #tpu.memory_space<vmem>>, vector<128x128xf32>
    %33 = vector.broadcast %31 : vector<1x1xf32> to vector<128x128xf32>
    %34 = arith.mulf %33, %32 : vector<128x128xf32>
    %35 = arith.addf %30, %34 : vector<128x128xf32>
    %36 = tpu.transpose %35, [1, 0] : vector<128x128xf32> -> vector<128x128xf32>
    %c0_30 = arith.constant 0 : index
    %c0_31 = arith.constant 0 : index
    %c0_32 = arith.constant 0 : index
    %37 = vector.load %arg13[%c0_30, %c0_31, %c0_32] : memref<1x128x128xf32, #tpu.memory_space<vmem>>, vector<1x128x128xf32>
    %38 = vector.shape_cast %37 : vector<1x128x128xf32> to vector<128x128xf32>
    %39 = vector.shape_cast %36 : vector<128x128xf32> to vector<1x128x128xf32>
    tpu.vector_store %arg13[%c0_30, %c0_31, %c0_32], %39 {strides = array<i32>} : memref<1x128x128xf32, #tpu.memory_space<vmem>>, vector<1x128x128xf32>,
    return
  }
  func.func @transform_0(%arg0: i32, %arg1: i32) -> (i32, i32, i32) {
    %c0_i32 = arith.constant 0 : i32
    %c0_i32_0 = arith.constant 0 : i32
    return %arg0, %c0_i32, %arg1 : i32, i32, i32
  }
  func.func @transform_1(%arg0: i32, %arg1: i32) -> (i32, i32) {
    %c0_i32 = arith.constant 0 : i32
    %c0_i32_0 = arith.constant 0 : i32
    %c0_i32_1 = arith.constant 0 : i32
    return %c0_i32, %c0_i32_0 : i32, i32
  }
  func.func @transform_2(%arg0: i32, %arg1: i32) -> (i32, i32) {
    %c0_i32 = arith.constant 0 : i32
    %c0_i32_0 = arith.constant 0 : i32
    %c0_i32_1 = arith.constant 0 : i32
    return %c0_i32, %c0_i32_0 : i32, i32
  }
  func.func @transform_3(%arg0: i32, %arg1: i32) -> (i32, i32) {
    %c0_i32 = arith.constant 0 : i32
    %c0_i32_0 = arith.constant 0 : i32
    %c0_i32_1 = arith.constant 0 : i32
    return %c0_i32, %c0_i32_0 : i32, i32
  }
  func.func @transform_4(%arg0: i32, %arg1: i32) -> (i32, i32) {
    %c0_i32 = arith.constant 0 : i32
    %c0_i32_0 = arith.constant 0 : i32
    %c0_i32_1 = arith.constant 0 : i32
    return %c0_i32, %c0_i32_0 : i32, i32
  }
  func.func @transform_5(%arg0: i32, %arg1: i32) -> (i32, i32) {
    %c0_i32 = arith.constant 0 : i32
    %c0_i32_0 = arith.constant 0 : i32
    %c0_i32_1 = arith.constant 0 : i32
    return %c0_i32, %c0_i32_0 : i32, i32
  }
  func.func @transform_6(%arg0: i32, %arg1: i32) -> (i32, i32) {
    %c0_i32 = arith.constant 0 : i32
    %c0_i32_0 = arith.constant 0 : i32
    %c0_i32_1 = arith.constant 0 : i32
    return %c0_i32, %c0_i32_0 : i32, i32
  }
  func.func @transform_7(%arg0: i32, %arg1: i32) -> (i32, i32, i32) {
    %c0_i32 = arith.constant 0 : i32
    %c0_i32_0 = arith.constant 0 : i32
    return %arg0, %c0_i32, %arg1 : i32, i32, i32
  }
  func.func @transform_8(%arg0: i32, %arg1: i32) -> (i32, i32, i32) {
    %c0_i32 = arith.constant 0 : i32
    %c0_i32_0 = arith.constant 0 : i32
    return %arg0, %c0_i32, %arg1 : i32, i32, i32
  }
  func.func @transform_9(%arg0: i32, %arg1: i32) -> (i32, i32) {
    %c0_i32 = arith.constant 0 : i32
    %c0_i32_0 = arith.constant 0 : i32
    return %c0_i32, %arg1 : i32, i32
  }
  func.func @transform_10(%arg0: i32, %arg1: i32) -> (i32, i32) {
    %c0_i32 = arith.constant 0 : i32
    %c0_i32_0 = arith.constant 0 : i32
    %c0_i32_1 = arith.constant 0 : i32
    return %c0_i32, %c0_i32_0 : i32, i32
  }
  func.func @transform_11(%arg0: i32, %arg1: i32) -> (i32, i32, i32) {
    %c0_i32 = arith.constant 0 : i32
    %c0_i32_0 = arith.constant 0 : i32
    return %arg0, %arg1, %c0_i32 : i32, i32, i32
  }
}

</mosaic_0001>

<llo_original>
// kernel: tpu_custom_call.1
$region0: #{tpu_custom_call.1}
  #allocation0 [shape = 'u32[]', space=smem, size = 0x4, offset = 0x4, fixed_abs, tag = 'smem constant byte address 0x4 - core index']
  #allocation1 [shape = 'u32[72,128]{1,0:T(1,128)}', space=vmem, size = 0x9000, scoped, tag = 'internal scratch']
  #allocation2 [shape = 'f32[1,1]{1,0:T(1,128)S(1)}', space=vmem, size = 0x200, scoped, tag = 'scoped memory for tpu_custom_call.1']
  %s0 = inlined_call_operand.vmem [shape: f32[2,32,128], index: 0, kind: input, shape index: {}]
  %s1 = inlined_call_operand.vmem [shape: f32[64,32], index: 1, kind: input, shape index: {}]
  %s2 = inlined_call_operand.vmem [shape: f32[64,1], index: 2, kind: input, shape index: {}]
  %s3 = inlined_call_operand.hbm [shape: f32[64,64], index: 3, kind: input, shape index: {}]
  %s4 = inlined_call_operand.vmem [shape: f32[64,1], index: 4, kind: input, shape index: {}]
  %s5 = inlined_call_operand.vmem [shape: f32[128,64], index: 5, kind: input, shape index: {}]
  %s6 = inlined_call_operand.vmem [shape: f32[128,1], index: 6, kind: input, shape index: {}]
  %s7 = inlined_call_operand.vmem [shape: f32[2,64,128], index: 7, kind: input, shape index: {}]
  %s8 = inlined_call_operand.vmem [shape: f32[2,64,128], index: 8, kind: input, shape index: {}]
  %s9 = inlined_call_operand.vmem [shape: f32[128,128], index: 9, kind: input, shape index: {}]
  %s10 = inlined_call_operand.<no memory space> [shape: f32[1,1], index: 10, kind: input, shape index: {}]
  %s11 = inlined_call_operand.hbm [shape: f32[2,128,128], index: 11, kind: output, shape index: {}]
  %s12 = sld [smem:[#allocation0]]
  $region81: #{tpu_custom_call.1} parent=0
    _
  %s14 = ssub.s32 1, %s12
  %s15 = scalar_select 0, %s14, %s12
  %v16 = vstv %s10
  %17 = vst [vmem:[#allocation2] sm:$0x1] %v16
  $region1: #{tpu_custom_call.1} parent=0
    #allocation3 [shape = 'u8[32768]{0}', space=vmem, size = 0x8000, scoped, tag = 'input window, operand 3, single buffered']
    #allocation4 [shape = 's32[2]{0}', space=sflag, size = 0x8, scoped, tag = 'scoped memory for tpu_custom_call.1']
    #allocation5 [shape = 's32[2]{0}', space=sflag, size = 0x8, scoped, tag = 'scoped memory for tpu_custom_call.1']
    #allocation6 [shape = 'u8[131072]{0}', space=vmem, size = 0x20000, scoped, tag = 'output window, operand 0']
    %18 = vsyncpa [#allocation4], 0
    %19 = vsyncpa [#allocation5], 0
    %s20 = scalar_lea.sflag [#allocation5], 1
    %21 = vsyncpa %s20, 0
    loop: start=0, step=1, limit=4
    $region2: #{tpu_custom_call.1} parent=1 // loop_pre_header
      _
    $region3: #{tpu_custom_call.1} parent=1 // loop_header
      %s23 = sphi 0, %s27
      %p24 = scmp.ge.s32.totalorder %s23, 4
      %s30 = sphi 0, %s42
      %s31 = sphi 0, %s38
      %s32 = sphi 0, %s30
      %s33 = sphi 0, %s31
      %s34 = sphi 0, %s32
      %s35 = sphi 0, %s33
      %s47 = sphi 0, %s49
      %s50 = sphi 0, %s47
      %s51 = sphi 0, %s50
      %s67 = sphi 0, %s51
      %s71 = sphi 0, %s71
      %s73 = sphi 0, %s71
      %s74 = sphi 0, %s73
      %s88 = sphi 0, %s74
      %s92 = sphi 0, %s92
      %s94 = sphi 0, %s92
      %s95 = sphi 0, %s94
      %s109 = sphi 0, %s95
      %s113 = sphi 0, %s113
      %s115 = sphi 0, %s113
      %s116 = sphi 0, %s115
      %s130 = sphi 0, %s116
      %s134 = sphi 0, %s134
      %s136 = sphi 0, %s134
      %s137 = sphi 0, %s136
      %s151 = sphi 0, %s137
      %s155 = sphi 0, %s155
      %s157 = sphi 0, %s155
      %s158 = sphi 0, %s157
      %s172 = sphi 0, %s158
      %s176 = sphi 0, %s176
      %s178 = sphi 0, %s176
      %s179 = sphi 0, %s178
      %s193 = sphi 0, %s179
      %s201 = sphi 0, %s203
      %s204 = sphi 0, %s201
      %s205 = sphi 0, %s204
      %s221 = sphi 0, %s205
      %s229 = sphi 0, %s231
      %s232 = sphi 0, %s229
      %s233 = sphi 0, %s232
      %s249 = sphi 0, %s233
      %s255 = sphi 0, %s257
      %s258 = sphi 0, %s255
      %s259 = sphi 0, %s258
      %s275 = sphi 0, %s259
      %s279 = sphi 0, %s279
      %s281 = sphi 0, %s279
      %s282 = sphi 0, %s281
      %s296 = sphi 0, %s282
      %s304 = sphi 0, %s306
      %s307 = sphi 0, %s304
      %s308 = sphi 0, %s307
      %s324 = sphi 0, %s308
    $region4: #{tpu_custom_call.1} parent=1 // loop_header_branch
      %26 = sbr.rel (%p24) target = $region8
    $region5: #{tpu_custom_call.1} parent=1 // loop_body
      %s28 = ssub.s32 %s23, 1
      %s29 = ssub.s32 %s23, 2
      %s36 = sadd.s32 1, %s31
      %p37 = scmp.ge.s32.totalorder %s36, 1
      %s38 = scalar_select %p37, 0, %s36
      %s39 = sadd.s32 1, %s30
      %s40 = scalar_select %p37, %s39, %s30
      %p41 = scmp.ge.s32.totalorder %s40, 2
      %s42 = scalar_select %p41, 0, %s40
      %s43 = ssub.s32 %s30, %s42
      %s44 = ssub.s32 %s31, %s38
      %s45 = sor.u32 %s43, %s44
      %p46 = scmp.eq.s32.totalorder %s45, 0
      %s48 = sadd.s32 %s47, 1
      %s49 = scalar_select %p46, %s47, %s48
      %p52 = pneg %p46
      %p53 = scmp.eq.s32.totalorder %s23, 1
      %p54 = por %p52, %p53
      %p55 = scmp.ne.s32.totalorder %s47, %s50
      %p56 = scmp.eq.s32.totalorder %s23, 0
      %p57 = por %p55, %p56
      %p58 = scmp.ne.s32.totalorder %s47, %s50
      %p59 = scmp.eq.s32.totalorder %s28, 1
      %p60 = por %p58, %p59
      %p61 = scmp.ne.s32.totalorder %s50, %s51
      %p62 = scmp.eq.s32.totalorder %s28, 0
      %p63 = por %p61, %p62
      %p64 = scmp.ne.s32.totalorder %s50, %s51
      %p65 = scmp.eq.s32.totalorder %s29, 1
      %p66 = por %p64, %p65
      %p68 = scmp.ne.s32.totalorder %s51, %s67
      %p69 = scmp.eq.s32.totalorder %s29, 0
      %p70 = por %p68, %p69
      %s72 = sadd.s32 %s71, 1
      %p75 = scmp.eq.s32.totalorder %s23, 1
      %p76 = scmp.ne.s32.totalorder %s71, %s73
      %p77 = scmp.eq.s32.totalorder %s23, 0
      %p78 = por %p76, %p77
      %p79 = scmp.ne.s32.totalorder %s71, %s73
      %p80 = scmp.eq.s32.totalorder %s28, 1
      %p81 = por %p79, %p80
      %p82 = scmp.ne.s32.totalorder %s73, %s74
      %p83 = scmp.eq.s32.totalorder %s28, 0
      %p84 = por %p82, %p83
      %p85 = scmp.ne.s32.totalorder %s73, %s74
      %p86 = scmp.eq.s32.totalorder %s29, 1
      %p87 = por %p85, %p86
      %p89 = scmp.ne.s32.totalorder %s74, %s88
      %p90 = scmp.eq.s32.totalorder %s29, 0
      %p91 = por %p89, %p90
      %s93 = sadd.s32 %s92, 1
      %p96 = scmp.eq.s32.totalorder %s23, 1
      %p97 = scmp.ne.s32.totalorder %s92, %s94
      %p98 = scmp.eq.s32.totalorder %s23, 0
      %p99 = por %p97, %p98
      %p100 = scmp.ne.s32.totalorder %s92, %s94
      %p101 = scmp.eq.s32.totalorder %s28, 1
      %p102 = por %p100, %p101
      %p103 = scmp.ne.s32.totalorder %s94, %s95
      %p104 = scmp.eq.s32.totalorder %s28, 0
      %p105 = por %p103, %p104
      %p106 = scmp.ne.s32.totalorder %s94, %s95
      %p107 = scmp.eq.s32.totalorder %s29, 1
      %p108 = por %p106, %p107
      %p110 = scmp.ne.s32.totalorder %s95, %s109
      %p111 = scmp.eq.s32.totalorder %s29, 0
      %p112 = por %p110, %p111
      %s114 = sadd.s32 %s113, 1
      %p117 = scmp.eq.s32.totalorder %s23, 1
      %p118 = scmp.ne.s32.totalorder %s113, %s115
      %p119 = scmp.eq.s32.totalorder %s23, 0
      %p120 = por %p118, %p119
      %p121 = scmp.ne.s32.totalorder %s113, %s115
      %p122 = scmp.eq.s32.totalorder %s28, 1
      %p123 = por %p121, %p122
      %p124 = scmp.ne.s32.totalorder %s115, %s116
      %p125 = scmp.eq.s32.totalorder %s28, 0
      %p126 = por %p124, %p125
      %p127 = scmp.ne.s32.totalorder %s115, %s116
      %p128 = scmp.eq.s32.totalorder %s29, 1
      %p129 = por %p127, %p128
      %p131 = scmp.ne.s32.totalorder %s116, %s130
      %p132 = scmp.eq.s32.totalorder %s29, 0
      %p133 = por %p131, %p132
      %s135 = sadd.s32 %s134, 1
      %p138 = scmp.eq.s32.totalorder %s23, 1
      %p139 = scmp.ne.s32.totalorder %s134, %s136
      %p140 = scmp.eq.s32.totalorder %s23, 0
      %p141 = por %p139, %p140
      %p142 = scmp.ne.s32.totalorder %s134, %s136
      %p143 = scmp.eq.s32.totalorder %s28, 1
      %p144 = por %p142, %p143
      %p145 = scmp.ne.s32.totalorder %s136, %s137
      %p146 = scmp.eq.s32.totalorder %s28, 0
      %p147 = por %p145, %p146
      %p148 = scmp.ne.s32.totalorder %s136, %s137
      %p149 = scmp.eq.s32.totalorder %s29, 1
      %p150 = por %p148, %p149
      %p152 = scmp.ne.s32.totalorder %s137, %s151
      %p153 = scmp.eq.s32.totalorder %s29, 0
      %p154 = por %p152, %p153
      %s156 = sadd.s32 %s155, 1
      %p159 = scmp.eq.s32.totalorder %s23, 1
      %p160 = scmp.ne.s32.totalorder %s155, %s157
      %p161 = scmp.eq.s32.totalorder %s23, 0
      %p162 = por %p160, %p161
      %p163 = scmp.ne.s32.totalorder %s155, %s157
      %p164 = scmp.eq.s32.totalorder %s28, 1
      %p165 = por %p163, %p164
      %p166 = scmp.ne.s32.totalorder %s157, %s158
      %p167 = scmp.eq.s32.totalorder %s28, 0
      %p168 = por %p166, %p167
      %p169 = scmp.ne.s32.totalorder %s157, %s158
      %p170 = scmp.eq.s32.totalorder %s29, 1
      %p171 = por %p169, %p170
      %p173 = scmp.ne.s32.totalorder %s158, %s172
      %p174 = scmp.eq.s32.totalorder %s29, 0
      %p175 = por %p173, %p174
      %s177 = sadd.s32 %s176, 1
      %p180 = scmp.eq.s32.totalorder %s23, 1
      %p181 = scmp.ne.s32.totalorder %s176, %s178
      %p182 = scmp.eq.s32.totalorder %s23, 0
      %p183 = por %p181, %p182
      %p184 = scmp.ne.s32.totalorder %s176, %s178
      %p185 = scmp.eq.s32.totalorder %s28, 1
      %p186 = por %p184, %p185
      %p187 = scmp.ne.s32.totalorder %s178, %s179
      %p188 = scmp.eq.s32.totalorder %s28, 0
      %p189 = por %p187, %p188
      %p190 = scmp.ne.s32.totalorder %s178, %s179
      %p191 = scmp.eq.s32.totalorder %s29, 1
      %p192 = por %p190, %p191
      %p194 = scmp.ne.s32.totalorder %s179, %s193
      %p195 = scmp.eq.s32.totalorder %s29, 0
      %p196 = por %p194, %p195
      %s197 = ssub.s32 %s30, %s42
      %s198 = ssub.s32 %s31, %s38
      %s199 = sor.u32 %s197, %s198
      %p200 = scmp.eq.s32.totalorder %s199, 0
      %s202 = sadd.s32 %s201, 1
      %s203 = scalar_select %p200, %s201, %s202
      %p206 = pneg %p200
      %p207 = scmp.eq.s32.totalorder %s23, 1
      %p208 = por %p206, %p207
      %p209 = scmp.ne.s32.totalorder %s201, %s204
      %p210 = scmp.eq.s32.totalorder %s23, 0
      %p211 = por %p209, %p210
      %p212 = scmp.ne.s32.totalorder %s201, %s204
      %p213 = scmp.eq.s32.totalorder %s28, 1
      %p214 = por %p212, %p213
      %p215 = scmp.ne.s32.totalorder %s204, %s205
      %p216 = scmp.eq.s32.totalorder %s28, 0
      %p217 = por %p215, %p216
      %p218 = scmp.ne.s32.totalorder %s204, %s205
      %p219 = scmp.eq.s32.totalorder %s29, 1
      %p220 = por %p218, %p219
      %p222 = scmp.ne.s32.totalorder %s205, %s221
      %p223 = scmp.eq.s32.totalorder %s29, 0
      %p224 = por %p222, %p223
      %s225 = ssub.s32 %s30, %s42
      %s226 = ssub.s32 %s31, %s38
      %s227 = sor.u32 %s225, %s226
      %p228 = scmp.eq.s32.totalorder %s227, 0
      %s230 = sadd.s32 %s229, 1
      %s231 = scalar_select %p228, %s229, %s230
      %p234 = pneg %p228
      %p235 = scmp.eq.s32.totalorder %s23, 1
      %p236 = por %p234, %p235
      %p237 = scmp.ne.s32.totalorder %s229, %s232
      %p238 = scmp.eq.s32.totalorder %s23, 0
      %p239 = por %p237, %p238
      %p240 = scmp.ne.s32.totalorder %s229, %s232
      %p241 = scmp.eq.s32.totalorder %s28, 1
      %p242 = por %p240, %p241
      %p243 = scmp.ne.s32.totalorder %s232, %s233
      %p244 = scmp.eq.s32.totalorder %s28, 0
      %p245 = por %p243, %p244
      %p246 = scmp.ne.s32.totalorder %s232, %s233
      %p247 = scmp.eq.s32.totalorder %s29, 1
      %p248 = por %p246, %p247
      %p250 = scmp.ne.s32.totalorder %s233, %s249
      %p251 = scmp.eq.s32.totalorder %s29, 0
      %p252 = por %p250, %p251
      %s253 = ssub.s32 %s31, %s38
      %p254 = scmp.eq.s32.totalorder %s253, 0
      %s256 = sadd.s32 %s255, 1
      %s257 = scalar_select %p254, %s255, %s256
      %p260 = pneg %p254
      %p261 = scmp.eq.s32.totalorder %s23, 1
      %p262 = por %p260, %p261
      %p263 = scmp.ne.s32.totalorder %s255, %s258
      %p264 = scmp.eq.s32.totalorder %s23, 0
      %p265 = por %p263, %p264
      %p266 = scmp.ne.s32.totalorder %s255, %s258
      %p267 = scmp.eq.s32.totalorder %s28, 1
      %p268 = por %p266, %p267
      %p269 = scmp.ne.s32.totalorder %s258, %s259
      %p270 = scmp.eq.s32.totalorder %s28, 0
      %p271 = por %p269, %p270
      %p272 = scmp.ne.s32.totalorder %s258, %s259
      %p273 = scmp.eq.s32.totalorder %s29, 1
      %p274 = por %p272, %p273
      %p276 = scmp.ne.s32.totalorder %s259, %s275
      %p277 = scmp.eq.s32.totalorder %s29, 0
      %p278 = por %p276, %p277
      %s280 = sadd.s32 %s279, 1
      %p283 = scmp.eq.s32.totalorder %s23, 1
      %p284 = scmp.ne.s32.totalorder %s279, %s281
      %p285 = scmp.eq.s32.totalorder %s23, 0
      %p286 = por %p284, %p285
      %p287 = scmp.ne.s32.totalorder %s279, %s281
      %p288 = scmp.eq.s32.totalorder %s28, 1
      %p289 = por %p287, %p288
      %p290 = scmp.ne.s32.totalorder %s281, %s282
      %p291 = scmp.eq.s32.totalorder %s28, 0
      %p292 = por %p290, %p291
      %p293 = scmp.ne.s32.totalorder %s281, %s282
      %p294 = scmp.eq.s32.totalorder %s29, 1
      %p295 = por %p293, %p294
      %p297 = scmp.ne.s32.totalorder %s282, %s296
      %p298 = scmp.eq.s32.totalorder %s29, 0
      %p299 = por %p297, %p298
      %s300 = ssub.s32 %s30, %s42
      %s301 = ssub.s32 %s31, %s38
      %s302 = sor.u32 %s300, %s301
      %p303 = scmp.eq.s32.totalorder %s302, 0
      %s305 = sadd.s32 %s304, 1
      %s306 = scalar_select %p303, %s304, %s305
      %p309 = pneg %p303
      %p310 = scmp.eq.s32.totalorder %s23, 1
      %p311 = por %p309, %p310
      %p312 = scmp.ne.s32.totalorder %s304, %s307
      %p313 = scmp.eq.s32.totalorder %s23, 0
      %p314 = por %p312, %p313
      %p315 = scmp.ne.s32.totalorder %s304, %s307
      %p316 = scmp.eq.s32.totalorder %s28, 1
      %p317 = por %p315, %p316
      %p318 = scmp.ne.s32.totalorder %s307, %s308
      %p319 = scmp.eq.s32.totalorder %s28, 0
      %p320 = por %p318, %p319
      %p321 = scmp.ne.s32.totalorder %s307, %s308
      %p322 = scmp.eq.s32.totalorder %s29, 1
      %p323 = por %p321, %p322
      %p325 = scmp.ne.s32.totalorder %s308, %s324
      %p326 = scmp.eq.s32.totalorder %s29, 0
      %p327 = por %p325, %p326
      %p328 = scmp.le.s32.totalorder 1, %s23
      %p329 = scmp.lt.s32.totalorder %s23, 3
      %p330 = pnand %p328, %p329
      %p331 = pneg %p330
      // Predicated region
      $region9: #{tpu_custom_call.1} parent=5 // pred_check
        _
      $region10: #{tpu_custom_call.1} parent=5 // pred_check_branch
        %333 = sbr.rel (%p330) target = $region12
      $region11: #{tpu_custom_call.1} parent=5 // pred_region
        %s334 = ssub.s32 %s23, 1
        // Predicated region
        $region13: #{tpu_custom_call.1} parent=11 // pred_check
          %p335 = pneg %p84
        $region14: #{tpu_custom_call.1} parent=11 // pred_check_branch
          %337 = sbr.rel (%p335) target = $region16
        $region15: #{tpu_custom_call.1} parent=11 // pred_region
          _
        $region16: #{tpu_custom_call.1} parent=11 // pred_fallthru
          _
        // Predicated region
        $region17: #{tpu_custom_call.1} parent=11 // pred_check
          %p338 = pneg %p105
        $region18: #{tpu_custom_call.1} parent=11 // pred_check_branch
          %340 = sbr.rel (%p338) target = $region20
        $region19: #{tpu_custom_call.1} parent=11 // pred_region
          _
        $region20: #{tpu_custom_call.1} parent=11 // pred_fallthru
          _
        // Predicated region
        $region21: #{tpu_custom_call.1} parent=11 // pred_check
          %p341 = pneg %p126
        $region22: #{tpu_custom_call.1} parent=11 // pred_check_branch
          %343 = sbr.rel (%p341) target = $region24
        $region23: #{tpu_custom_call.1} parent=11 // pred_region
          %345 = vsyncadd [#allocation4], 0
          %s346 = sshll.u32 %s3, 4
          %s347 = int_to_ptr.hbm [resolvable:$true] %s346
          %s348 = sshll.u32 [#allocation3], 4
          %s349 = int_to_ptr.vmem [resolvable:$true] %s348
          %354 = dma.hbm_to_vmem [thread:$0]  %s347, 1024, %s349, [#allocation4], 128, 128, 8
        $region24: #{tpu_custom_call.1} parent=11 // pred_fallthru
          _
        // Predicated region
        $region25: #{tpu_custom_call.1} parent=11 // pred_check
          %p355 = pneg %p147
        $region26: #{tpu_custom_call.1} parent=11 // pred_check_branch
          %357 = sbr.rel (%p355) target = $region28
        $region27: #{tpu_custom_call.1} parent=11 // pred_region
          _
        $region28: #{tpu_custom_call.1} parent=11 // pred_fallthru
          _
        // Predicated region
        $region29: #{tpu_custom_call.1} parent=11 // pred_check
          %p358 = pneg %p168
        $region30: #{tpu_custom_call.1} parent=11 // pred_check_branch
          %360 = sbr.rel (%p358) target = $region32
        $region31: #{tpu_custom_call.1} parent=11 // pred_region
          _
        $region32: #{tpu_custom_call.1} parent=11 // pred_fallthru
          _
        // Predicated region
        $region33: #{tpu_custom_call.1} parent=11 // pred_check
          %p361 = pneg %p189
        $region34: #{tpu_custom_call.1} parent=11 // pred_check_branch
          %363 = sbr.rel (%p361) target = $region36
        $region35: #{tpu_custom_call.1} parent=11 // pred_region
          _
        $region36: #{tpu_custom_call.1} parent=11 // pred_fallthru
          _
        // Predicated region
        $region37: #{tpu_custom_call.1} parent=11 // pred_check
          %p364 = pneg %p271
        $region38: #{tpu_custom_call.1} parent=11 // pred_check_branch
          %366 = sbr.rel (%p364) target = $region40
        $region39: #{tpu_custom_call.1} parent=11 // pred_region
          %p367 = scmp.lt.s32.totalorder %s33, 0
          %s368 = scalar_select %p367, %s33, 0
          %s369 = smul.addr %s368, 8
          %s370 = scalar_lea.vmem %s9, %s369
        $region40: #{tpu_custom_call.1} parent=11 // pred_fallthru
          _
        // Predicated region
        $region41: #{tpu_custom_call.1} parent=11 // pred_check
          %p371 = pneg %p292
        $region42: #{tpu_custom_call.1} parent=11 // pred_check_branch
          %373 = sbr.rel (%p371) target = $region44
        $region43: #{tpu_custom_call.1} parent=11 // pred_region
          _
        $region44: #{tpu_custom_call.1} parent=11 // pred_fallthru
          _
      $region12: #{tpu_custom_call.1} parent=5 // pred_fallthru
        _
      %p374 = scmp.lt.s32.totalorder %s23, 2
      // Predicated region
      $region45: #{tpu_custom_call.1} parent=5 // pred_check
        %p375 = pneg %p374
      $region46: #{tpu_custom_call.1} parent=5 // pred_check_branch
        %377 = sbr.rel (%p375) target = $region48
      $region47: #{tpu_custom_call.1} parent=5 // pred_region
        // Predicated region
        $region49: #{tpu_custom_call.1} parent=47 // pred_check
          %p378 = pneg %p57
        $region50: #{tpu_custom_call.1} parent=47 // pred_check_branch
          %380 = sbr.rel (%p378) target = $region52
        $region51: #{tpu_custom_call.1} parent=47 // pred_region
          %p381 = scmp.lt.s32.totalorder %s30, 1
          %s382 = scalar_select %p381, %s30, 1
          %p383 = scmp.lt.s32.totalorder %s31, 0
          %s384 = scalar_select %p383, %s31, 0
          %s385 = smul.addr %s382, 4
          %s386 = sadd.s32 %s384, %s385
          %s387 = smul.addr %s386, 8
          %s388 = scalar_lea.vmem %s0, %s387
        $region52: #{tpu_custom_call.1} parent=47 // pred_fallthru
          _
        // Predicated region
        $region53: #{tpu_custom_call.1} parent=47 // pred_check
          %p389 = pneg %p211
        $region54: #{tpu_custom_call.1} parent=47 // pred_check_branch
          %391 = sbr.rel (%p389) target = $region56
        $region55: #{tpu_custom_call.1} parent=47 // pred_region
          %p392 = scmp.lt.s32.totalorder %s30, 1
          %s393 = scalar_select %p392, %s30, 1
          %p394 = scmp.lt.s32.totalorder %s31, 0
          %s395 = scalar_select %p394, %s31, 0
          %s396 = smul.addr %s393, 8
          %s397 = sadd.s32 %s395, %s396
          %s398 = smul.addr %s397, 8
          %s399 = scalar_lea.vmem %s7, %s398
        $region56: #{tpu_custom_call.1} parent=47 // pred_fallthru
          _
        // Predicated region
        $region57: #{tpu_custom_call.1} parent=47 // pred_check
          %p400 = pneg %p239
        $region58: #{tpu_custom_call.1} parent=47 // pred_check_branch
          %402 = sbr.rel (%p400) target = $region60
        $region59: #{tpu_custom_call.1} parent=47 // pred_region
          %p403 = scmp.lt.s32.totalorder %s30, 1
          %s404 = scalar_select %p403, %s30, 1
          %p405 = scmp.lt.s32.totalorder %s31, 0
          %s406 = scalar_select %p405, %s31, 0
          %s407 = smul.addr %s404, 8
          %s408 = sadd.s32 %s406, %s407
          %s409 = smul.addr %s408, 8
          %s410 = scalar_lea.vmem %s8, %s409
        $region60: #{tpu_custom_call.1} parent=47 // pred_fallthru
          _
      $region48: #{tpu_custom_call.1} parent=5 // pred_fallthru
        _
      %p411 = scmp.le.s32.totalorder 1, %s23
      %p412 = scmp.lt.s32.totalorder %s23, 3
      %p413 = pnand %p411, %p412
      %p414 = pneg %p413
      // Predicated region
      $region61: #{tpu_custom_call.1} parent=5 // pred_check
        _
      $region62: #{tpu_custom_call.1} parent=5 // pred_check_branch
        %416 = sbr.rel (%p413) target = $region64
      $region63: #{tpu_custom_call.1} parent=5 // pred_region
        %s417 = ssub.s32 %s23, 1
        // Predicated region
        $region65: #{tpu_custom_call.1} parent=63 // pred_check
          %p418 = pneg %p126
        $region66: #{tpu_custom_call.1} parent=63 // pred_check_branch
          %420 = sbr.rel (%p418) target = $region68
        $region67: #{tpu_custom_call.1} parent=63 // pred_region
          %422 = dma.done [#allocation4], 1024
        $region68: #{tpu_custom_call.1} parent=63 // pred_fallthru
          _
        %p423 = scmp.lt.s32.totalorder %s32, 1
        %s424 = scalar_select %p423, %s32, 1
        %p425 = scmp.lt.s32.totalorder %s33, 0
        %s426 = scalar_select %p425, %s33, 0
        %s427 = smul.addr %s424, 4
        %s428 = sadd.s32 %s426, %s427
        %s429 = smul.addr %s428, 8
        %s430 = scalar_lea.vmem %s0, %s429
        %p431 = pneg %p63
        %p432 = pneg %p60
        %p433 = pneg %p84
        %p434 = pneg %p81
        %p435 = pneg %p105
        %p436 = pneg %p102
        %p437 = pneg %p126
        %p438 = pneg %p123
        %p439 = pneg %p147
        %p440 = pneg %p144
        %p441 = pneg %p168
        %p442 = pneg %p165
        %p443 = pneg %p189
        %p444 = pneg %p186
        %p445 = scmp.lt.s32.totalorder %s32, 1
        %s446 = scalar_select %p445, %s32, 1
        %p447 = scmp.lt.s32.totalorder %s33, 0
        %s448 = scalar_select %p447, %s33, 0
        %s449 = smul.addr %s446, 8
        %s450 = sadd.s32 %s448, %s449
        %s451 = smul.addr %s450, 8
        %s452 = scalar_lea.vmem %s7, %s451
        %p453 = pneg %p217
        %p454 = pneg %p214
        %p455 = scmp.lt.s32.totalorder %s32, 1
        %s456 = scalar_select %p455, %s32, 1
        %p457 = scmp.lt.s32.totalorder %s33, 0
        %s458 = scalar_select %p457, %s33, 0
        %s459 = smul.addr %s456, 8
        %s460 = sadd.s32 %s458, %s459
        %s461 = smul.addr %s460, 8
        %s462 = scalar_lea.vmem %s8, %s461
        %p463 = pneg %p245
        %p464 = pneg %p242
        %p465 = scmp.lt.s32.totalorder %s33, 0
        %s466 = scalar_select %p465, %s33, 0
        %s467 = smul.addr %s466, 8
        %s468 = scalar_lea.vmem %s9, %s467
        %p469 = pneg %p271
        %p470 = pneg %p268
        %p471 = pneg %p292
        %p472 = pneg %p289
        %p473 = pneg %p320
        %p474 = pneg %p317
        %s475 = sand.u32 %s307, 1
        %s476 = scalar_lea.sflag [#allocation5], %s475
        %s477 = sand.u32 %s307, 1
        %s478 = smul.addr %s477, 128
        %s479 = scalar_lea.vmem [#allocation6], %s478
        %p480 = scmp.lt.s32.totalorder %s32, 1
        %s481 = scalar_select %p480, %s32, 1
        %p482 = scmp.lt.s32.totalorder %s33, 0
        %s483 = scalar_select %p482, %s33, 0
        %s484 = smul.addr %s481, 4
        %s485 = sadd.s32 %s483, %s484
        %s486 = smul.addr %s485, 8
        %s487 = scalar_lea.vmem %s0, %s486
        %p488 = scmp.lt.s32.totalorder %s32, 1
        %s489 = scalar_select %p488, %s32, 1
        %p490 = scmp.lt.s32.totalorder %s33, 0
        %s491 = scalar_select %p490, %s33, 0
        %s492 = smul.addr %s489, 8
        %s493 = sadd.s32 %s491, %s492
        %s494 = smul.addr %s493, 8
        %s495 = scalar_lea.vmem %s7, %s494
        %p496 = scmp.lt.s32.totalorder %s32, 1
        %s497 = scalar_select %p496, %s32, 1
        %p498 = scmp.lt.s32.totalorder %s33, 0
        %s499 = scalar_select %p498, %s33, 0
        %s500 = smul.addr %s497, 8
        %s501 = sadd.s32 %s499, %s500
        %s502 = smul.addr %s501, 8
        %s503 = scalar_lea.vmem %s8, %s502
        %p504 = scmp.lt.s32.totalorder %s33, 0
        %s505 = scalar_select %p504, %s33, 0
        %s506 = smul.addr %s505, 8
        %s507 = scalar_lea.vmem %s9, %s506
        %s508 = smul.u32 16, %s33
        %v509 = vld [vmem:[%s487] sm:$0xff]
        %v510 = vld [vmem:[%s487 + $0x8] sm:$0xff]
        %v511 = vld [vmem:[%s487 + $0x10] sm:$0xff]
        %v512 = vld [vmem:[%s487 + $0x18] sm:$0xff]
        %v513 = vld [vmem:[%s1] sm:$0xff]
        %v514 = vld [vmem:[%s1 + $0x8] sm:$0xff]
        %v515 = vld [vmem:[%s1 + $0x10] sm:$0xff]
        %v516 = vld [vmem:[%s1 + $0x18] sm:$0xff]
        %v517 = vld [vmem:[%s1 + $0x20] sm:$0xff]
        %v518 = vld [vmem:[%s1 + $0x28] sm:$0xff]
        %v519 = vld [vmem:[%s1 + $0x30] sm:$0xff]
        %v520 = vld [vmem:[%s1 + $0x38] sm:$0xff]
        %v521 = vld [vmem:[%s2] sm:$0xff]
        %v522 = vld [vmem:[%s2 + $0x8] sm:$0xff]
        %v523 = vld [vmem:[%s2 + $0x10] sm:$0xff]
        %v524 = vld [vmem:[%s2 + $0x18] sm:$0xff]
        %v525 = vld [vmem:[%s2 + $0x20] sm:$0xff]
        %v526 = vld [vmem:[%s2 + $0x28] sm:$0xff]
        %v527 = vld [vmem:[%s2 + $0x30] sm:$0xff]
        %v528 = vld [vmem:[%s2 + $0x38] sm:$0xff]
        %530 = vset.pattern.permute.xlu0 0
        %531 = vperm.xlu0 %530, %v521
        %v532 = vpop.permute.xlu0 %531
        %535 = vset.pattern.permute.xlu0 0
        %536 = vperm.xlu0 %535, %v522
        %v537 = vpop.permute.xlu0 %536
        %540 = vset.pattern.permute.xlu0 0
        %541 = vperm.xlu0 %540, %v523
        %v542 = vpop.permute.xlu0 %541
        %545 = vset.pattern.permute.xlu0 0
        %546 = vperm.xlu0 %545, %v524
        %v547 = vpop.permute.xlu0 %546
        %550 = vset.pattern.permute.xlu0 0
        %551 = vperm.xlu0 %550, %v525
        %v552 = vpop.permute.xlu0 %551
        %555 = vset.pattern.permute.xlu0 0
        %556 = vperm.xlu0 %555, %v526
        %v557 = vpop.permute.xlu0 %556
        %560 = vset.pattern.permute.xlu0 0
        %561 = vperm.xlu0 %560, %v527
        %v562 = vpop.permute.xlu0 %561
        %565 = vset.pattern.permute.xlu0 0
        %566 = vperm.xlu0 %565, %v528
        %v567 = vpop.permute.xlu0 %566
        %vm569 = vcmask 261120
        %v571 = vsel %vm569, %v513, 0
        %v574 = vsel %vm569, %v514, 0
        %v577 = vsel %vm569, %v515, 0
        %v580 = vsel %vm569, %v516, 0
        %v583 = vsel %vm569, %v517, 0
        %v586 = vsel %vm569, %v518, 0
        %v589 = vsel %vm569, %v519, 0
        %v592 = vsel %vm569, %v520, 0
        %594 = vmatpush.msra.mxu0 0.0
        %595 = vmatpush.msra.mxu0 0.0
        %596 = vmatpush.msra.mxu0 0.0
        %597 = vmatpush.msra.mxu0 0.0
        %598 = vmatpush.msra.mxu0 0.0
        %599 = vmatpush.msra.mxu0 0.0
        %600 = vmatpush.msra.mxu0 0.0
        %601 = vmatpush.msra.mxu0 0.0
        %602 = vmatpush.msra.mxu0 0.0
        %603 = vmatpush.msra.mxu0 0.0
        %604 = vmatpush.msra.mxu0 0.0
        %605 = vmatpush.msra.mxu0 0.0
        %606 = vmatpush.msra.mxu0 %v512
        %607 = vmatpush.msra.mxu0 %v511
        %608 = vmatpush.msra.mxu0 %v510
        %609 = vmatpush.msra.mxu0 %v509
        %610 = vmatmul.f32.gmra.mxu0 %v571
        %v611 = vpop.f32.mrf.mxu0
        %v612 = vadd.f32 %v532, %v611
        %613 = vmatmul.f32.gmra.mxu0 %v574
        %v614 = vpop.f32.mrf.mxu0
        %v615 = vadd.f32 %v537, %v614
        %616 = vmatmul.f32.gmra.mxu0 %v577
        %v617 = vpop.f32.mrf.mxu0
        %v618 = vadd.f32 %v542, %v617
        %619 = vmatmul.f32.gmra.mxu0 %v580
        %v620 = vpop.f32.mrf.mxu0
        %v621 = vadd.f32 %v547, %v620
        %622 = vmatmul.f32.gmra.mxu0 %v583
        %v623 = vpop.f32.mrf.mxu0
        %v624 = vadd.f32 %v552, %v623
        %625 = vmatmul.f32.gmra.mxu0 %v586
        %v626 = vpop.f32.mrf.mxu0
        %v627 = vadd.f32 %v557, %v626
        %628 = vmatmul.f32.gmra.mxu0 %v589
        %v629 = vpop.f32.mrf.mxu0
        %v630 = vadd.f32 %v562, %v629
        %631 = vmatmul.f32.gmra.mxu0 %v592
        %v632 = vpop.f32.mrf.mxu0
        %v633 = vadd.f32 %v567, %v632
        %634 = vdwg.mxu0
        %v635 = vmax.f32 %v612, 0.0
        %v636 = vmax.f32 %v615, 0.0
        %v637 = vmax.f32 %v618, 0.0
        %v638 = vmax.f32 %v621, 0.0
        %v639 = vmax.f32 %v624, 0.0
        %v640 = vmax.f32 %v627, 0.0
        %v641 = vmax.f32 %v630, 0.0
        %v642 = vmax.f32 %v633, 0.0
        %v643 = vld [vmem:[%s495] sm:$0xff]
        %v644 = vld [vmem:[%s495 + $0x8] sm:$0xff]
        %v645 = vld [vmem:[%s495 + $0x10] sm:$0xff]
        %v646 = vld [vmem:[%s495 + $0x18] sm:$0xff]
        %v647 = vld [vmem:[%s495 + $0x20] sm:$0xff]
        %v648 = vld [vmem:[%s495 + $0x28] sm:$0xff]
        %v649 = vld [vmem:[%s495 + $0x30] sm:$0xff]
        %v650 = vld [vmem:[%s495 + $0x38] sm:$0xff]
        %v651 = vmul.f32 %v643, 2.0
        %v652 = vmul.f32 %v644, 2.0
        %v653 = vmul.f32 %v645, 2.0
        %v654 = vmul.f32 %v646, 2.0
        %v655 = vmul.f32 %v647, 2.0
        %v656 = vmul.f32 %v648, 2.0
        %v657 = vmul.f32 %v649, 2.0
        %v658 = vmul.f32 %v650, 2.0
        %v659 = vmul.f32 %v635, %v651
        %v660 = vmul.f32 %v636, %v652
        %v661 = vmul.f32 %v637, %v653
        %v662 = vmul.f32 %v638, %v654
        %v663 = vmul.f32 %v639, %v655
        %v664 = vmul.f32 %v640, %v656
        %v665 = vmul.f32 %v641, %v657
        %v666 = vmul.f32 %v642, %v658
        %v667 = vld [vmem:[#allocation3] sm:$0xff]
        %v668 = vld [vmem:[#allocation3 + $0x8] sm:$0xff]
        %v669 = vld [vmem:[#allocation3 + $0x10] sm:$0xff]
        %v670 = vld [vmem:[#allocation3 + $0x18] sm:$0xff]
        %v671 = vld [vmem:[#allocation3 + $0x20] sm:$0xff]
        %v672 = vld [vmem:[#allocation3 + $0x28] sm:$0xff]
        %v673 = vld [vmem:[#allocation3 + $0x30] sm:$0xff]
        %v674 = vld [vmem:[#allocation3 + $0x38] sm:$0xff]
        %v675 = vld [vmem:[%s4] sm:$0xff]
        %v676 = vld [vmem:[%s4 + $0x8] sm:$0xff]
        %v677 = vld [vmem:[%s4 + $0x10] sm:$0xff]
        %v678 = vld [vmem:[%s4 + $0x18] sm:$0xff]
        %v679 = vld [vmem:[%s4 + $0x20] sm:$0xff]
        %v680 = vld [vmem:[%s4 + $0x28] sm:$0xff]
        %v681 = vld [vmem:[%s4 + $0x30] sm:$0xff]
        %v682 = vld [vmem:[%s4 + $0x38] sm:$0xff]
        %684 = vset.pattern.permute.xlu0 0
        %685 = vperm.xlu0 %684, %v675
        %v686 = vpop.permute.xlu0 %685
        %689 = vset.pattern.permute.xlu0 0
        %690 = vperm.xlu0 %689, %v676
        %v691 = vpop.permute.xlu0 %690
        %694 = vset.pattern.permute.xlu0 0
        %695 = vperm.xlu0 %694, %v677
        %v696 = vpop.permute.xlu0 %695
        %699 = vset.pattern.permute.xlu0 0
        %700 = vperm.xlu0 %699, %v678
        %v701 = vpop.permute.xlu0 %700
        %704 = vset.pattern.permute.xlu0 0
        %705 = vperm.xlu0 %704, %v679
        %v706 = vpop.permute.xlu0 %705
        %709 = vset.pattern.permute.xlu0 0
        %710 = vperm.xlu0 %709, %v680
        %v711 = vpop.permute.xlu0 %710
        %714 = vset.pattern.permute.xlu0 0
        %715 = vperm.xlu0 %714, %v681
        %v716 = vpop.permute.xlu0 %715
        %719 = vset.pattern.permute.xlu0 0
        %720 = vperm.xlu0 %719, %v682
        %v721 = vpop.permute.xlu0 %720
        %vm723 = vcmask 523264
        %v725 = vsel %vm723, %v667, 0
        %v728 = vsel %vm723, %v668, 0
        %v731 = vsel %vm723, %v669, 0
        %v734 = vsel %vm723, %v670, 0
        %v737 = vsel %vm723, %v671, 0
        %v740 = vsel %vm723, %v672, 0
        %v743 = vsel %vm723, %v673, 0
        %v746 = vsel %vm723, %v674, 0
        %748 = vmatpush.msra.mxu0 0.0
        %749 = vmatpush.msra.mxu0 0.0
        %750 = vmatpush.msra.mxu0 0.0
        %751 = vmatpush.msra.mxu0 0.0
        %752 = vmatpush.msra.mxu0 0.0
        %753 = vmatpush.msra.mxu0 0.0
        %754 = vmatpush.msra.mxu0 0.0
        %755 = vmatpush.msra.mxu0 0.0
        %756 = vmatpush.msra.mxu0 %v666
        %757 = vmatpush.msra.mxu0 %v665
        %758 = vmatpush.msra.mxu0 %v664
        %759 = vmatpush.msra.mxu0 %v663
        %760 = vmatpush.msra.mxu0 %v662
        %761 = vmatpush.msra.mxu0 %v661
        %762 = vmatpush.msra.mxu0 %v660
        %763 = vmatpush.msra.mxu0 %v659
        %764 = vmatmul.f32.gmra.mxu0 %v725
        %v765 = vpop.f32.mrf.mxu0
        %v766 = vadd.f32 %v686, %v765
        %767 = vmatmul.f32.gmra.mxu0 %v728
        %v768 = vpop.f32.mrf.mxu0
        %v769 = vadd.f32 %v691, %v768
        %770 = vmatmul.f32.gmra.mxu0 %v731
        %v771 = vpop.f32.mrf.mxu0
        %v772 = vadd.f32 %v696, %v771
        %773 = vmatmul.f32.gmra.mxu0 %v734
        %v774 = vpop.f32.mrf.mxu0
        %v775 = vadd.f32 %v701, %v774
        %776 = vmatmul.f32.gmra.mxu0 %v737
        %v777 = vpop.f32.mrf.mxu0
        %v778 = vadd.f32 %v706, %v777
        %779 = vmatmul.f32.gmra.mxu0 %v740
        %v780 = vpop.f32.mrf.mxu0
        %v781 = vadd.f32 %v711, %v780
        %782 = vmatmul.f32.gmra.mxu0 %v743
        %v783 = vpop.f32.mrf.mxu0
        %v784 = vadd.f32 %v716, %v783
        %785 = vmatmul.f32.gmra.mxu0 %v746
        %v786 = vpop.f32.mrf.mxu0
        %v787 = vadd.f32 %v721, %v786
        %788 = vdwg.mxu0
        %v789 = vmax.f32 %v766, 0.0
        %v790 = vmax.f32 %v769, 0.0
        %v791 = vmax.f32 %v772, 0.0
        %v792 = vmax.f32 %v775, 0.0
        %v793 = vmax.f32 %v778, 0.0
        %v794 = vmax.f32 %v781, 0.0
        %v795 = vmax.f32 %v784, 0.0
        %v796 = vmax.f32 %v787, 0.0
        %v797 = vld [vmem:[%s503] sm:$0xff]
        %v798 = vld [vmem:[%s503 + $0x8] sm:$0xff]
        %v799 = vld [vmem:[%s503 + $0x10] sm:$0xff]
        %v800 = vld [vmem:[%s503 + $0x18] sm:$0xff]
        %v801 = vld [vmem:[%s503 + $0x20] sm:$0xff]
        %v802 = vld [vmem:[%s503 + $0x28] sm:$0xff]
        %v803 = vld [vmem:[%s503 + $0x30] sm:$0xff]
        %v804 = vld [vmem:[%s503 + $0x38] sm:$0xff]
        %v805 = vmul.f32 %v797, 2.0
        %v806 = vmul.f32 %v798, 2.0
        %v807 = vmul.f32 %v799, 2.0
        %v808 = vmul.f32 %v800, 2.0
        %v809 = vmul.f32 %v801, 2.0
        %v810 = vmul.f32 %v802, 2.0
        %v811 = vmul.f32 %v803, 2.0
        %v812 = vmul.f32 %v804, 2.0
        %v813 = vmul.f32 %v789, %v805
        %v814 = vmul.f32 %v790, %v806
        %v815 = vmul.f32 %v791, %v807
        %v816 = vmul.f32 %v792, %v808
        %v817 = vmul.f32 %v793, %v809
        %v818 = vmul.f32 %v794, %v810
        %v819 = vmul.f32 %v795, %v811
        %v820 = vmul.f32 %v796, %v812
        %v821 = vld [vmem:[%s5] sm:$0xff]
        %v822 = vld [vmem:[%s5 + $0x8] sm:$0xff]
        %v823 = vld [vmem:[%s5 + $0x10] sm:$0xff]
        %v824 = vld [vmem:[%s5 + $0x18] sm:$0xff]
        %v825 = vld [vmem:[%s5 + $0x20] sm:$0xff]
        %v826 = vld [vmem:[%s5 + $0x28] sm:$0xff]
        %v827 = vld [vmem:[%s5 + $0x30] sm:$0xff]
        %v828 = vld [vmem:[%s5 + $0x38] sm:$0xff]
        %v829 = vld [vmem:[%s5 + $0x40] sm:$0xff]
        %v830 = vld [vmem:[%s5 + $0x48] sm:$0xff]
        %v831 = vld [vmem:[%s5 + $0x50] sm:$0xff]
        %v832 = vld [vmem:[%s5 + $0x58] sm:$0xff]
        %v833 = vld [vmem:[%s5 + $0x60] sm:$0xff]
        %v834 = vld [vmem:[%s5 + $0x68] sm:$0xff]
        %v835 = vld [vmem:[%s5 + $0x70] sm:$0xff]
        %v836 = vld [vmem:[%s5 + $0x78] sm:$0xff]
        %v837 = vld [vmem:[%s6] sm:$0xff]
        %v838 = vld [vmem:[%s6 + $0x8] sm:$0xff]
        %v839 = vld [vmem:[%s6 + $0x10] sm:$0xff]
        %v840 = vld [vmem:[%s6 + $0x18] sm:$0xff]
        %v841 = vld [vmem:[%s6 + $0x20] sm:$0xff]
        %v842 = vld [vmem:[%s6 + $0x28] sm:$0xff]
        %v843 = vld [vmem:[%s6 + $0x30] sm:$0xff]
        %v844 = vld [vmem:[%s6 + $0x38] sm:$0xff]
        %v845 = vld [vmem:[%s6 + $0x40] sm:$0xff]
        %v846 = vld [vmem:[%s6 + $0x48] sm:$0xff]
        %v847 = vld [vmem:[%s6 + $0x50] sm:$0xff]
        %v848 = vld [vmem:[%s6 + $0x58] sm:$0xff]
        %v849 = vld [vmem:[%s6 + $0x60] sm:$0xff]
        %v850 = vld [vmem:[%s6 + $0x68] sm:$0xff]
        %v851 = vld [vmem:[%s6 + $0x70] sm:$0xff]
        %v852 = vld [vmem:[%s6 + $0x78] sm:$0xff]
        %854 = vset.pattern.permute.xlu0 0
        %855 = vperm.xlu0 %854, %v837
        %v856 = vpop.permute.xlu0 %855
        %859 = vset.pattern.permute.xlu0 0
        %860 = vperm.xlu0 %859, %v838
        %v861 = vpop.permute.xlu0 %860
        %864 = vset.pattern.permute.xlu0 0
        %865 = vperm.xlu0 %864, %v839
        %v866 = vpop.permute.xlu0 %865
        %869 = vset.pattern.permute.xlu0 0
        %870 = vperm.xlu0 %869, %v840
        %v871 = vpop.permute.xlu0 %870
        %874 = vset.pattern.permute.xlu0 0
        %875 = vperm.xlu0 %874, %v841
        %v876 = vpop.permute.xlu0 %875
        %879 = vset.pattern.permute.xlu0 0
        %880 = vperm.xlu0 %879, %v842
        %v881 = vpop.permute.xlu0 %880
        %884 = vset.pattern.permute.xlu0 0
        %885 = vperm.xlu0 %884, %v843
        %v886 = vpop.permute.xlu0 %885
        %889 = vset.pattern.permute.xlu0 0
        %890 = vperm.xlu0 %889, %v844
        %v891 = vpop.permute.xlu0 %890
        %894 = vset.pattern.permute.xlu0 0
        %895 = vperm.xlu0 %894, %v845
        %v896 = vpop.permute.xlu0 %895
        %899 = vset.pattern.permute.xlu0 0
        %900 = vperm.xlu0 %899, %v846
        %v901 = vpop.permute.xlu0 %900
        %904 = vset.pattern.permute.xlu0 0
        %905 = vperm.xlu0 %904, %v847
        %v906 = vpop.permute.xlu0 %905
        %909 = vset.pattern.permute.xlu0 0
        %910 = vperm.xlu0 %909, %v848
        %v911 = vpop.permute.xlu0 %910
        %914 = vset.pattern.permute.xlu0 0
        %915 = vperm.xlu0 %914, %v849
        %v916 = vpop.permute.xlu0 %915
        %919 = vset.pattern.permute.xlu0 0
        %920 = vperm.xlu0 %919, %v850
        %v921 = vpop.permute.xlu0 %920
        %924 = vset.pattern.permute.xlu0 0
        %925 = vperm.xlu0 %924, %v851
        %v926 = vpop.permute.xlu0 %925
        %929 = vset.pattern.permute.xlu0 0
        %930 = vperm.xlu0 %929, %v852
        %v931 = vpop.permute.xlu0 %930
        %v934 = vsel %vm723, %v821, 0
        %v937 = vsel %vm723, %v822, 0
        %v940 = vsel %vm723, %v823, 0
        %v943 = vsel %vm723, %v824, 0
        %v946 = vsel %vm723, %v825, 0
        %v949 = vsel %vm723, %v826, 0
        %v952 = vsel %vm723, %v827, 0
        %v955 = vsel %vm723, %v828, 0
        %v958 = vsel %vm723, %v829, 0
        %v961 = vsel %vm723, %v830, 0
        %v964 = vsel %vm723, %v831, 0
        %v967 = vsel %vm723, %v832, 0
        %v970 = vsel %vm723, %v833, 0
        %v973 = vsel %vm723, %v834, 0
        %v976 = vsel %vm723, %v835, 0
        %v979 = vsel %vm723, %v836, 0
        %981 = vmatpush.msra.mxu0 0.0
        %982 = vmatpush.msra.mxu0 0.0
        %983 = vmatpush.msra.mxu0 0.0
        %984 = vmatpush.msra.mxu0 0.0
        %985 = vmatpush.msra.mxu0 0.0
        %986 = vmatpush.msra.mxu0 0.0
        %987 = vmatpush.msra.mxu0 0.0
        %988 = vmatpush.msra.mxu0 0.0
        %989 = vmatpush.msra.mxu0 %v820
        %990 = vmatpush.msra.mxu0 %v819
        %991 = vmatpush.msra.mxu0 %v818
        %992 = vmatpush.msra.mxu0 %v817
        %993 = vmatpush.msra.mxu0 %v816
        %994 = vmatpush.msra.mxu0 %v815
        %995 = vmatpush.msra.mxu0 %v814
        %996 = vmatpush.msra.mxu0 %v813
        %997 = vmatmul.f32.gmra.mxu0 %v934
        %v998 = vpop.f32.mrf.mxu0
        %v999 = vadd.f32 %v856, %v998
        %1000 = vmatmul.f32.gmra.mxu0 %v937
        %v1001 = vpop.f32.mrf.mxu0
        %v1002 = vadd.f32 %v861, %v1001
        %1003 = vmatmul.f32.gmra.mxu0 %v940
        %v1004 = vpop.f32.mrf.mxu0
        %v1005 = vadd.f32 %v866, %v1004
        %1006 = vmatmul.f32.gmra.mxu0 %v943
        %v1007 = vpop.f32.mrf.mxu0
        %v1008 = vadd.f32 %v871, %v1007
        %1009 = vmatmul.f32.gmra.mxu0 %v946
        %v1010 = vpop.f32.mrf.mxu0
        %v1011 = vadd.f32 %v876, %v1010
        %1012 = vmatmul.f32.gmra.mxu0 %v949
        %v1013 = vpop.f32.mrf.mxu0
        %v1014 = vadd.f32 %v881, %v1013
        %1015 = vmatmul.f32.gmra.mxu0 %v952
        %v1016 = vpop.f32.mrf.mxu0
        %v1017 = vadd.f32 %v886, %v1016
        %1018 = vmatmul.f32.gmra.mxu0 %v955
        %v1019 = vpop.f32.mrf.mxu0
        %v1020 = vadd.f32 %v891, %v1019
        %1021 = vmatmul.f32.gmra.mxu0 %v958
        %v1022 = vpop.f32.mrf.mxu0
        %v1023 = vadd.f32 %v896, %v1022
        %1024 = vmatmul.f32.gmra.mxu0 %v961
        %v1025 = vpop.f32.mrf.mxu0
        %v1026 = vadd.f32 %v901, %v1025
        %1027 = vmatmul.f32.gmra.mxu0 %v964
        %v1028 = vpop.f32.mrf.mxu0
        %v1029 = vadd.f32 %v906, %v1028
        %1030 = vmatmul.f32.gmra.mxu0 %v967
        %v1031 = vpop.f32.mrf.mxu0
        %v1032 = vadd.f32 %v911, %v1031
        %1033 = vmatmul.f32.gmra.mxu0 %v970
        %v1034 = vpop.f32.mrf.mxu0
        %v1035 = vadd.f32 %v916, %v1034
        %1036 = vmatmul.f32.gmra.mxu0 %v973
        %v1037 = vpop.f32.mrf.mxu0
        %v1038 = vadd.f32 %v921, %v1037
        %1039 = vmatmul.f32.gmra.mxu0 %v976
        %v1040 = vpop.f32.mrf.mxu0
        %v1041 = vadd.f32 %v926, %v1040
        %1042 = vmatmul.f32.gmra.mxu0 %v979
        %v1043 = vpop.f32.mrf.mxu0
        %v1044 = vadd.f32 %v931, %v1043
        %1045 = vdwg.mxu0
        %v1046 = vld [vmem:[#allocation2] sm:$0x1]
        %v1047 = vld [vmem:[%s507] sm:$0xff]
        %v1048 = vld [vmem:[%s507 + $0x8] sm:$0xff]
        %v1049 = vld [vmem:[%s507 + $0x10] sm:$0xff]
        %v1050 = vld [vmem:[%s507 + $0x18] sm:$0xff]
        %v1051 = vld [vmem:[%s507 + $0x20] sm:$0xff]
        %v1052 = vld [vmem:[%s507 + $0x28] sm:$0xff]
        %v1053 = vld [vmem:[%s507 + $0x30] sm:$0xff]
        %v1054 = vld [vmem:[%s507 + $0x38] sm:$0xff]
        %v1055 = vld [vmem:[%s507 + $0x40] sm:$0xff]
        %v1056 = vld [vmem:[%s507 + $0x48] sm:$0xff]
        %v1057 = vld [vmem:[%s507 + $0x50] sm:$0xff]
        %v1058 = vld [vmem:[%s507 + $0x58] sm:$0xff]
        %v1059 = vld [vmem:[%s507 + $0x60] sm:$0xff]
        %v1060 = vld [vmem:[%s507 + $0x68] sm:$0xff]
        %v1061 = vld [vmem:[%s507 + $0x70] sm:$0xff]
        %v1062 = vld [vmem:[%s507 + $0x78] sm:$0xff]
        %v1064 = vperm.slane %v1046, 0
        %1065 = vset.pattern.permute.xlu0 0
        %1066 = vperm.xlu0 %1065, %v1064
        %v1067 = vpop.permute.xlu0 %1066
        %v1069 = vmul.f32 %v1067, %v1047
        %v1070 = vmul.f32 %v1067, %v1048
        %v1071 = vmul.f32 %v1067, %v1049
        %v1072 = vmul.f32 %v1067, %v1050
        %v1073 = vmul.f32 %v1067, %v1051
        %v1074 = vmul.f32 %v1067, %v1052
        %v1075 = vmul.f32 %v1067, %v1053
        %v1076 = vmul.f32 %v1067, %v1054
        %v1077 = vmul.f32 %v1067, %v1055
        %v1078 = vmul.f32 %v1067, %v1056
        %v1079 = vmul.f32 %v1067, %v1057
        %v1080 = vmul.f32 %v1067, %v1058
        %v1081 = vmul.f32 %v1067, %v1059
        %v1082 = vmul.f32 %v1067, %v1060
        %v1083 = vmul.f32 %v1067, %v1061
        %v1084 = vmul.f32 %v1067, %v1062
        %v1085 = vadd.f32 %v999, %v1069
        %v1086 = vadd.f32 %v1002, %v1070
        %v1087 = vadd.f32 %v1005, %v1071
        %v1088 = vadd.f32 %v1008, %v1072
        %v1089 = vadd.f32 %v1011, %v1073
        %v1090 = vadd.f32 %v1014, %v1074
        %v1091 = vadd.f32 %v1017, %v1075
        %v1092 = vadd.f32 %v1020, %v1076
        %v1093 = vadd.f32 %v1023, %v1077
        %v1094 = vadd.f32 %v1026, %v1078
        %v1095 = vadd.f32 %v1029, %v1079
        %v1096 = vadd.f32 %v1032, %v1080
        %v1097 = vadd.f32 %v1035, %v1081
        %v1098 = vadd.f32 %v1038, %v1082
        %v1099 = vadd.f32 %v1041, %v1083
        %v1100 = vadd.f32 %v1044, %v1084
        %1101 = vxpose.xlu0.b32.start [1/16] %v1085, 128
        %1102 = vxpose.xlu0.b32.cont [2/16] %v1086, 128
        %1103 = vxpose.xlu0.b32.cont [3/16] %v1087, 128
        %1104 = vxpose.xlu0.b32.cont [4/16] %v1088, 128
        %1105 = vxpose.xlu0.b32.cont [5/16] %v1089, 128
        %1106 = vxpose.xlu0.b32.cont [6/16] %v1090, 128
        %1107 = vxpose.xlu0.b32.cont [7/16] %v1091, 128
        %1108 = vxpose.xlu0.b32.cont [8/16] %v1092, 128
        %1109 = vxpose.xlu0.b32.cont [9/16] %v1093, 128
        %1110 = vxpose.xlu0.b32.cont [10/16] %v1094, 128
        %1111 = vxpose.xlu0.b32.cont [11/16] %v1095, 128
        %1112 = vxpose.xlu0.b32.cont [12/16] %v1096, 128
        %1113 = vxpose.xlu0.b32.cont [13/16] %v1097, 128
        %1114 = vxpose.xlu0.b32.cont [14/16] %v1098, 128
        %1115 = vxpose.xlu0.b32.cont [15/16] %v1099, 128
        %1116 = vxpose.xlu0.b32.end [16/16] %v1100, 128
        %v1117 = vpop.trf.xlu0
        %v1118 = vpop.trf.xlu0
        %v1119 = vpop.trf.xlu0
        %v1120 = vpop.trf.xlu0
        %v1121 = vpop.trf.xlu0
        %v1122 = vpop.trf.xlu0
        %v1123 = vpop.trf.xlu0
        %v1124 = vpop.trf.xlu0
        %v1125 = vpop.trf.xlu0
        %v1126 = vpop.trf.xlu0
        %v1127 = vpop.trf.xlu0
        %v1128 = vpop.trf.xlu0
        %v1129 = vpop.trf.xlu0
        %v1130 = vpop.trf.xlu0
        %v1131 = vpop.trf.xlu0
        %v1132 = vpop.trf.xlu0
        %1133 = vst [vmem:[%s479] sm:$0xff] %v1117
        %1134 = vst [vmem:[%s479 + $0x8] sm:$0xff] %v1118
        %1135 = vst [vmem:[%s479 + $0x10] sm:$0xff] %v1119
        %1136 = vst [vmem:[%s479 + $0x18] sm:$0xff] %v1120
        %1137 = vst [vmem:[%s479 + $0x20] sm:$0xff] %v1121
        %1138 = vst [vmem:[%s479 + $0x28] sm:$0xff] %v1122
        %1139 = vst [vmem:[%s479 + $0x30] sm:$0xff] %v1123
        %1140 = vst [vmem:[%s479 + $0x38] sm:$0xff] %v1124
        %1141 = vst [vmem:[%s479 + $0x40] sm:$0xff] %v1125
        %1142 = vst [vmem:[%s479 + $0x48] sm:$0xff] %v1126
        %1143 = vst [vmem:[%s479 + $0x50] sm:$0xff] %v1127
        %1144 = vst [vmem:[%s479 + $0x58] sm:$0xff] %v1128
        %1145 = vst [vmem:[%s479 + $0x60] sm:$0xff] %v1129
        %1146 = vst [vmem:[%s479 + $0x68] sm:$0xff] %v1130
        %1147 = vst [vmem:[%s479 + $0x70] sm:$0xff] %v1131
        %1148 = vst [vmem:[%s479 + $0x78] sm:$0xff] %v1132
        %s1149 = sand.u32 %s307, 1
        %s1150 = scalar_lea.sflag [#allocation5], %s1149
        %s1151 = sand.u32 %s307, 1
        %s1152 = smul.addr %s1151, 128
        %s1153 = scalar_lea.vmem [#allocation6], %s1152
        // Predicated region
        $region69: #{tpu_custom_call.1} parent=63 // pred_check
          %p1154 = pneg %p317
        $region70: #{tpu_custom_call.1} parent=63 // pred_check_branch
          %1156 = sbr.rel (%p1154) target = $region72
        $region71: #{tpu_custom_call.1} parent=63 // pred_region
          %s1157 = smul.u32 16, %s33
          %1159 = vsyncadd %s1150, 0
          %s1160 = smul.addr %s32, 16
          %s1161 = sadd.s32 %s1157, %s1160
          %s1162 = smul.addr %s1161, 8
          %s1163 = scalar_lea.hbm %s11, %s1162
          %s1164 = sshll.u32 %s1153, 4
          %s1165 = int_to_ptr.vmem [resolvable:$true] %s1164
          %s1166 = sshll.u32 %s1163, 4
          %s1167 = int_to_ptr.hbm [resolvable:$true] %s1166
          %1172 = dma.vmem_to_hbm [thread:$0]  %s1165, 2048, %s1167, %s1150, 128, 128, 8
        $region72: #{tpu_custom_call.1} parent=63 // pred_fallthru
          _
      $region64: #{tpu_custom_call.1} parent=5 // pred_fallthru
        _
      %p1173 = scmp.le.s32.totalorder 2, %s23
      // Predicated region
      $region73: #{tpu_custom_call.1} parent=5 // pred_check
        %p1174 = pneg %p1173
      $region74: #{tpu_custom_call.1} parent=5 // pred_check_branch
        %1176 = sbr.rel (%p1174) target = $region76
      $region75: #{tpu_custom_call.1} parent=5 // pred_region
        %s1177 = ssub.s32 %s23, 2
        // Predicated region
        $region77: #{tpu_custom_call.1} parent=75 // pred_check
          %p1178 = pneg %p323
        $region78: #{tpu_custom_call.1} parent=75 // pred_check_branch
          %1180 = sbr.rel (%p1178) target = $region80
        $region79: #{tpu_custom_call.1} parent=75 // pred_region
          %s1181 = sand.u32 %s308, 1
          %s1182 = scalar_lea.sflag [#allocation5], %s1181
          %s1183 = sand.u32 %s308, 1
          %s1184 = smul.addr %s1183, 128
          %s1185 = scalar_lea.vmem [#allocation6], %s1184
          %1187 = dma.done %s1182, 2048
        $region80: #{tpu_custom_call.1} parent=75 // pred_fallthru
          _
      $region76: #{tpu_custom_call.1} parent=5 // pred_fallthru
        _
    $region6: #{tpu_custom_call.1} parent=1 // loop_footer
      %s27 = sadd.s32 1, %s23
    $region7: #{tpu_custom_call.1} parent=1 // loop_footer_branch
      %22 = sbr.rel target = $region3
    $region8: #{tpu_custom_call.1} parent=1 // loop_exit
      _
    %1188 = vsyncpa [#allocation4], 1
    %s1189 = scalar_lea.sflag [#allocation4], 1
    %1190 = vsyncpa %s1189, 1
    %1191 = vsyncpa [#allocation5], 1
    %s1192 = scalar_lea.sflag [#allocation5], 1
    %1193 = vsyncpa %s1192, 1

</llo_original>
